<compile_context>
chip_gen: v7x
topology: tpu7x:2x2x1
jax: 0.10.0
libtpu: 0.0.40
codegen_flags: <defaults>
</compile_context>

<pallas_src>
import math
import functools

import jax
import jax.numpy as jnp
from jax.experimental import pallas as pl
from jax.experimental.pallas import tpu as pltpu

LANE = 128


# ----------------------------------------------------------------------------
# Parameter setup (mirrors PositionalEncoding.__init__)
# ----------------------------------------------------------------------------
def make_positional_encoding_table(d_model: int, max_len: int) -> jnp.ndarray:
    """Builds pe of shape (1, max_len, d_model), float32 (same as the buffer)."""
    position = jnp.arange(0, max_len, dtype=jnp.float32)[:, None]           # (L, 1)
    div_term = jnp.exp(
        jnp.arange(0, d_model, 2, dtype=jnp.float32)
        * -(math.log(10000.0) / d_model)
    )                                                                         # (D/2,)
    pe = jnp.zeros((max_len, d_model), dtype=jnp.float32)
    pe = pe.at[:, 0::2].set(jnp.sin(position * div_term))
    pe = pe.at[:, 1::2].set(jnp.cos(position * div_term))
    return pe[None, :, :]                                                     # (1, L, D)


# ----------------------------------------------------------------------------
# Kernels (operate on the flattened (B, S*D) view)
# ----------------------------------------------------------------------------
def _pe_add_kernel(x_ref, pe_ref, o_ref):
    # x_ref: (B, tl), pe_ref: (1, tl) -> sublane-broadcast add over batch rows.
    o_ref[...] = (x_ref[...] + pe_ref[...]).astype(o_ref.dtype)


def _pe_add_dropout_kernel(x_ref, pe_ref, bits_ref, o_ref, *, threshold, scale):
    # Inverted dropout: keep iff bits >= round(p * 2^32)  (P(keep) = 1 - p),
    # kept values scaled by 1/(1-p).
    y = x_ref[...] + pe_ref[...]
    keep = bits_ref[...] >= jnp.uint32(threshold)
    y_scaled = y * jnp.asarray(scale, dtype=y.dtype)
    o_ref[...] = jnp.where(keep, y_scaled, jnp.zeros_like(y_scaled)).astype(o_ref.dtype)


# ----------------------------------------------------------------------------
# Wrapper
# ----------------------------------------------------------------------------
def _choose_row_tile(L: int, B: int, itemsize: int) -> int:
    """Pick a lane-dense tile along the fused (S*D) axis, ~1 MiB per x block."""
    if L <= LANE or L % LANE != 0:
        # Full-extent last dim is always legal (and the only option if L<128
        # or L is not lane-aligned -- typical only for tiny toy shapes).
        return L
    target_elems = max(LANE, (1 << 20) // (itemsize * max(B, 1)))
    tl = (target_elems // LANE) * LANE
    return int(min(L, max(LANE, tl)))


def positional_encoding_forward(x, pe, *, dropout_p: float, training: bool,
                                rng_key=None):
    """x: (B, S, D); pe: (1, max_len, D) float32 buffer."""
    B, S, D = x.shape
    L = S * D
    itemsize = jnp.dtype(x.dtype).itemsize

    x2 = x.reshape(B, L)                                   # free relabel
    pe2 = pe[0, :S, :].astype(x.dtype).reshape(1, L)       # match activation dtype

    tl = _choose_row_tile(L, B, itemsize)
    grid = (pl.cdiv(L, tl),)

    x_spec = pl.BlockSpec((B, tl), lambda l: (0, l))
    pe_spec = pl.BlockSpec((1, tl), lambda l: (0, l))
    out_spec = pl.BlockSpec((B, tl), lambda l: (0, l))
    out_shape = jax.ShapeDtypeStruct((B, L), x.dtype)
    cparams = pltpu.CompilerParams(dimension_semantics=("parallel",))

    if (not training) or dropout_p == 0.0:
        # Dropout is identity in eval mode (matches nn.Dropout semantics).
        cost = pl.CostEstimate(
            flops=B * L, transcendentals=0,
            bytes_accessed=(2 * B * L + L) * itemsize)
        out2 = pl.pallas_call(
            _pe_add_kernel,
            out_shape=out_shape,
            grid=grid,
            in_specs=[x_spec, pe_spec],
            out_specs=out_spec,
            compiler_params=cparams,
            cost_estimate=cost,
        )(x2, pe2)
        return out2.reshape(B, S, D)

    if rng_key is None:
        rng_key = jax.random.PRNGKey(0)
    bits = jax.random.bits(rng_key, (B, L), dtype=jnp.uint32)
    threshold = min(int(round(float(dropout_p) * 2.0 ** 32)), 2 ** 32 - 1)
    scale = 1.0 / (1.0 - float(dropout_p))

    bits_spec = pl.BlockSpec((B, tl), lambda l: (0, l))
    kernel = functools.partial(_pe_add_dropout_kernel,
                               threshold=threshold, scale=scale)
    cost = pl.CostEstimate(
        flops=3 * B * L, transcendentals=0,
        bytes_accessed=(2 * B * L + L) * itemsize + 4 * B * L)
    out2 = pl.pallas_call(
        kernel,
        out_shape=out_shape,
        grid=grid,
        in_specs=[x_spec, pe_spec, bits_spec],
        out_specs=out_spec,
        compiler_params=cparams,
        cost_estimate=cost,
    )(x2, pe2, bits)
    return out2.reshape(B, S, D)


# ----------------------------------------------------------------------------
# Main
# ----------------------------------------------------------------------------
if __name__ == "__main__":
    B, S, D = 2, 8, 32
    MAX_LEN = 16
    DROPOUT_P = 0.1

    key = jax.random.PRNGKey(0)
    x = jax.random.normal(key, (B, S, D), dtype=jnp.float32)
    pe = make_positional_encoding_table(D, MAX_LEN)
    ref = x + pe[:, :S, :]

    # Eval-mode forward (dropout is identity) — check against pure-JAX reference.
    out_eval = positional_encoding_forward(x, pe, dropout_p=DROPOUT_P, training=False)
    out_eval = jax.block_until_ready(out_eval)
    assert out_eval.shape == (B, S, D) and out_eval.dtype == jnp.float32
    assert jnp.allclose(out_eval, ref, atol=1e-6, rtol=1e-6)

    # Train-mode forward (inverted dropout) — every output element must be
    # either 0 (dropped) or (x + pe) / (1 - p) (kept and rescaled).
    out_train = positional_encoding_forward(
        x, pe, dropout_p=DROPOUT_P, training=True, rng_key=jax.random.PRNGKey(1))
    out_train = jax.block_until_ready(out_train)
    assert out_train.shape == (B, S, D)
    scaled_ref = ref / (1.0 - DROPOUT_P)
    ok = jnp.logical_or(out_train == 0.0,
                        jnp.isclose(out_train, scaled_ref, atol=1e-5, rtol=1e-5))
    assert bool(jnp.all(ok))

    print("KERNEL_OK")
</pallas_src>

<mosaic_0001>
module attributes {stable_mosaic.version = 11 : i64} {
  func.func @_pe_add_kernel(%arg0: i32, %arg1: memref<2x256xf32, #tpu.memory_space<vmem>>, %arg2: memref<1x256xf32, #tpu.memory_space<vmem>>, %arg3: memref<2x256xf32, #tpu.memory_space<vmem>>) attributes {dimension_semantics = [#tpu.dimension_semantics<parallel>], iteration_bounds = array<i64: 1>, scalar_prefetch = 0 : i64, scratch_operands = 0 : i64, tpu.core_type = #tpu.core_type<tc>, window_params = [{transform_indices = @transform_0, window_bounds = array<i64: 2, 256>}, {transform_indices = @transform_1, window_bounds = array<i64: 1, 256>}, {transform_indices = @transform_2, window_bounds = array<i64: 2, 256>}]} {
    %c0 = arith.constant 0 : index
    %c0_0 = arith.constant 0 : index
    %0 = vector.load %arg1[%c0, %c0_0] : memref<2x256xf32, #tpu.memory_space<vmem>>, vector<2x256xf32>
    %c0_1 = arith.constant 0 : index
    %c0_2 = arith.constant 0 : index
    %1 = vector.load %arg2[%c0_1, %c0_2] : memref<1x256xf32, #tpu.memory_space<vmem>>, vector<1x256xf32>
    %2 = vector.broadcast %1 : vector<1x256xf32> to vector<2x256xf32>
    %3 = arith.addf %0, %2 : vector<2x256xf32>
    %c0_3 = arith.constant 0 : index
    %c0_4 = arith.constant 0 : index
    %4 = vector.load %arg3[%c0_3, %c0_4] : memref<2x256xf32, #tpu.memory_space<vmem>>, vector<2x256xf32>
    tpu.vector_store %arg3[%c0_3, %c0_4], %3 {strides = array<i32>} : memref<2x256xf32, #tpu.memory_space<vmem>>, vector<2x256xf32>,
    return
  }
  func.func @transform_0(%arg0: i32) -> (i32, i32) {
    %c0_i32 = arith.constant 0 : i32
    %c0_i32_0 = arith.constant 0 : i32
    return %c0_i32, %arg0 : i32, i32
  }
  func.func @transform_1(%arg0: i32) -> (i32, i32) {
    %c0_i32 = arith.constant 0 : i32
    %c0_i32_0 = arith.constant 0 : i32
    return %c0_i32, %arg0 : i32, i32
  }
  func.func @transform_2(%arg0: i32) -> (i32, i32) {
    %c0_i32 = arith.constant 0 : i32
    %c0_i32_0 = arith.constant 0 : i32
    return %c0_i32, %arg0 : i32, i32
  }
}

</mosaic_0001>

<llo_original>
// kernel: tpu_custom_call.1
$region0: #{tpu_custom_call.1}
  #allocation0 [shape = 'u32[]', space=smem, size = 0x4, offset = 0x4, fixed_abs, tag = 'smem constant byte address 0x4 - core index']
  #allocation1 [shape = 'u32[144,128]{1,0:T(1,128)}', space=vmem, size = 0x12000, scoped, tag = 'internal scratch']
  %s0 = inlined_call_operand.hbm [shape: f32[2,256], index: 0, kind: input, shape index: {}]
  %s1 = inlined_call_operand.vmem [shape: f32[1,256], index: 1, kind: input, shape index: {}]
  %s2 = inlined_call_operand.hbm [shape: f32[2,256], index: 2, kind: output, shape index: {}]
  %s3 = sld [smem:[#allocation0]]
  $region22: #{tpu_custom_call.1} parent=0
    _
  %s5 = ssub.s32 1, %s3
  %s6 = scalar_select 0, %s5, %s3
  $region1: #{tpu_custom_call.1} parent=0
    #allocation2 [shape = 'u8[2048]{0}', space=vmem, size = 0x800, scoped, tag = 'input window, operand 0, single buffered']
    #allocation3 [shape = 's32[1]{0}', space=sflag, size = 0x4, scoped, tag = 'scoped memory for tpu_custom_call.1']
    #allocation4 [shape = 's32[1]{0}', space=sflag, size = 0x4, scoped, tag = 'scoped memory for tpu_custom_call.1']
    #allocation5 [shape = 'u8[2048]{0}', space=vmem, size = 0x800, scoped, tag = 'output window, operand 0, single buffered']
    %7 = vsyncpa [#allocation3], 0
    %8 = vsyncpa [#allocation4], 0
    // Predicated region
    $region2: #{tpu_custom_call.1} parent=1 // pred_check
      _
    $region3: #{tpu_custom_call.1} parent=1 // pred_check_branch
      %10 = sbr.rel (0) target = $region5
    $region4: #{tpu_custom_call.1} parent=1 // pred_region
      %s12 = ssub.s32 64, 64
      %13 = vsyncadd [#allocation3], %s12
      %s15 = sshll.u32 [#allocation2], 4
      %s16 = int_to_ptr.vmem [resolvable:$true] %s15
      %18 = dma.hbm_to_vmem [thread:$0]  %s0, 64, %s16, [#allocation3]
    $region5: #{tpu_custom_call.1} parent=1 // pred_fallthru
      _
    // Predicated region
    $region6: #{tpu_custom_call.1} parent=1 // pred_check
      _
    $region7: #{tpu_custom_call.1} parent=1 // pred_check_branch
      %20 = sbr.rel (0) target = $region9
    $region8: #{tpu_custom_call.1} parent=1 // pred_region
      _
    $region9: #{tpu_custom_call.1} parent=1 // pred_fallthru
      _
    // Predicated region
    $region10: #{tpu_custom_call.1} parent=1 // pred_check
      _
    $region11: #{tpu_custom_call.1} parent=1 // pred_check_branch
      %22 = sbr.rel (0) target = $region13
    $region12: #{tpu_custom_call.1} parent=1 // pred_region
      %23 = dma.done [#allocation3], 64
    $region13: #{tpu_custom_call.1} parent=1 // pred_fallthru
      _
    %v24 = vld [vmem:[#allocation2] sm:$0xf]
    %v25 = vld [vmem:[%s1] sm:$0x3]
    %v27 = vlaneseq
    %v28 = vshrl.u32 %v27, 7
    %v29 = vsub.s32 0, %v28
    %v30 = vrot.slane %v25, %v29
    %v31 = vlaneseq
    %v32 = vshrl.u32 %v31, 7
    %v33 = vsub.s32 1, %v32
    %v34 = vrot.slane %v25, %v33
    %v35 = vcombine.low %v30, %v34
    %v37 = vunpack.c.l.s4 1983009808
    %v38 = vunpack.c.0.s8 %v37
    %v39 = vlaneseq
    %v40 = vshrl.u32 %v39, 7
    %v41 = vsub.s32 %v38, %v40
    %v42 = vrot.slane %v35, %v41
    %v44 = vadd.f32 %v24, %v42
    %45 = vst [vmem:[#allocation5] sm:$0xf] %v44
    // Predicated region
    $region14: #{tpu_custom_call.1} parent=1 // pred_check
      _
    $region15: #{tpu_custom_call.1} parent=1 // pred_check_branch
      %47 = sbr.rel (0) target = $region17
    $region16: #{tpu_custom_call.1} parent=1 // pred_region
      %s49 = ssub.s32 64, 64
      %50 = vsyncadd [#allocation4], %s49
      %s52 = sshll.u32 [#allocation5], 4
      %s53 = int_to_ptr.vmem [resolvable:$true] %s52
      %55 = dma.vmem_to_hbm [thread:$0]  %s53, 64, %s2, [#allocation4]
    $region17: #{tpu_custom_call.1} parent=1 // pred_fallthru
      _
    // Predicated region
    $region18: #{tpu_custom_call.1} parent=1 // pred_check
      _
    $region19: #{tpu_custom_call.1} parent=1 // pred_check_branch
      %57 = sbr.rel (0) target = $region21
    $region20: #{tpu_custom_call.1} parent=1 // pred_region
      %58 = dma.done [#allocation4], 64
    $region21: #{tpu_custom_call.1} parent=1 // pred_fallthru
      _
    %59 = vsyncpa [#allocation3], 1
    %60 = vsyncpa [#allocation4], 1

</llo_original>
